<compile_context>
chip_gen: v5e
topology: v5e:2x2
jax: 0.10.0
libtpu: 0.0.40
codegen_flags: <defaults>
</compile_context>

<pallas_src>
import math

import jax
import jax.numpy as jnp
import numpy as np
from jax.experimental import pallas as pl
from jax.experimental.pallas import tpu as pltpu


# ----------------------------- hardware budgets -----------------------------

def _vmem_capacity_bytes():
    """Physical VMEM per TensorCore; conservative (v7x, 64 MiB) fallback."""
    try:
        info = pltpu.get_tpu_info()
        cap = int(getattr(info, "vmem_capacity_bytes", 0) or 0)
        if cap > 0:
            return cap
    except Exception:
        pass
    return 64 * 1024 * 1024


def _budgets():
    cap = max(_vmem_capacity_bytes(), 32 * 1024 * 1024)
    # Scoped VMEM for the kernel: 3/4 of physical, capped at 100 MiB
    # (-> ~96 MiB on v5e/v6e's 128 MiB, ~48 MiB on v7x's 64 MiB per TC).
    vmem_limit = int(min(cap * 3 // 4, 100 * 1024 * 1024))
    # Fresh (single-buffered) bytes per grid step: ~cap/8 amortizes the
    # ~0.35 us/step overhead (16 MiB on v5e/v6e, 8 MiB on v7x) while leaving
    # room for BlockSpec double-buffering inside vmem_limit.
    fresh_cap = int(max(cap // 8, 4 * 1024 * 1024))
    return vmem_limit, fresh_cap


# ------------------------------- kernel bodies -------------------------------

def _selection_matrix(f, w_in, rows_out, wo, dtype):
    """(rows_out*f*w_in, rows_out*wo) 0/1 map: window-anchor lanes -> dense."""
    hw = rows_out * f * w_in
    anchors = (np.arange(rows_out)[:, None] * (f * w_in) +
               np.arange(wo)[None, :] * f).ravel()
    s = np.zeros((hw, rows_out * wo), dtype=dtype)
    s[anchors, np.arange(rows_out * wo)] = 1
    return jnp.asarray(s)


def _make_kernel(f1, f2, w1, w2, in_dtype):
    has_s = (f1 > 1) or (f2 > 1)
    # Exact 0/1 selection for f32 through the MXU (free: kernel is HBM-bound);
    # bf16 inputs keep the native single-pass matmul.
    precision = (jax.lax.Precision.HIGHEST
                 if jnp.dtype(in_dtype) == jnp.float32 else None)

    def kernel(*refs):
        if has_s:
            s_ref, a_ref, b_ref, o_ref = refs
        else:
            a_ref, b_ref, o_ref = refs
            s_ref = None

        def contrib(ref, f, w_in):
            v = ref[0]                           # (C_blk, lanes), lane-dense
            if f == 1:
                return v
            hw = v.shape[-1]
            # Separable log-tree window max: 2*log2(f) rolls (W then H) put
            # each f x f window's max on its anchor lane.
            m = v
            step = 1
            while step < f:                      # along W
                m = jnp.maximum(m, pltpu.roll(m, shift=hw - step, axis=1))
                step *= 2
            step = w_in
            while step < f * w_in:               # along H
                m = jnp.maximum(m, pltpu.roll(m, shift=hw - step, axis=1))
                step *= 2
            # Compact anchor lanes into a dense (C_blk, rows*wo) tile with a
            # 0/1 selection matmul on the otherwise-idle MXU.
            return jnp.dot(m, s_ref[...],
                           preferred_element_type=jnp.float32,
                           precision=precision).astype(v.dtype)

        av = contrib(a_ref, f1, w1)
        bv = contrib(b_ref, f2, w2)

        ca, cb = av.shape[0], bv.shape[0]
        if ca == cb:
            out = av + bv
        elif ca < cb:     # `a` is the (virtually) zero-padded tensor
            out = jnp.concatenate([av + bv[:ca], bv[ca:]], axis=0)
        else:
            out = jnp.concatenate([av[:cb] + bv, av[cb:]], axis=0)
        o_ref[0] = out.astype(o_ref.dtype)       # single full-block store

    return kernel, has_s


def _add_kernel(a_ref, b_ref, o_ref):
    o_ref[...] = a_ref[...] + b_ref[...]


# ------------------------------ tiling decisions ------------------------------

def _choose_splits(c1, c2, cmax, ho, wo, f1, f2, w1, w2, itemsize,
                   vmem_limit, fresh_cap):
    """Pick (channel_split, spatial_split) for grid axes 1 and 2."""
    has_s = (f1 > 1) or (f2 > 1)
    fp, wp = (f1, w1) if f1 > 1 else (f2, w2)

    if c1 == c2:
        k_cands = [k for k in range(1, c1 + 1)
                   if c1 % k == 0 and (k == 1 or (c1 // k) % 8 == 0)]
    else:
        # Mismatched channel counts: the zero-pad tail is handled in-kernel,
        # so the whole channel extent stays in one block; the spatial axis
        # below keeps the footprint bounded instead.
        k_cands = [1]

    s_cands = []
    for s in range(1, ho + 1):
        if ho % s:
            continue
        rho = ho // s
        # Pool-row aligned (roll wrap-around stays correct) and lane-dense.
        if s == 1 or ((rho * f1 * w1) % 128 == 0 and
                      (rho * f2 * w2) % 128 == 0 and
                      (rho * wo) % 128 == 0):
            s_cands.append(s)

    best = None
    for kk in k_cands:
        for ss in s_cands:
            rho = ho // ss
            fresh = itemsize * (c1 // kk * rho * f1 * w1 +
                                c2 // kk * rho * f2 * w2 +
                                cmax // kk * rho * wo)
            s_bytes = itemsize * (rho * fp * wp) * (rho * wo) if has_s else 0
            fits = (2 * fresh + 2 * s_bytes <= (vmem_limit * 4) // 5
                    and fresh <= fresh_cap)
            # Feasible: largest blocks (fewest steps). Infeasible: best effort
            # with the most splitting available.
            key = (0, kk * ss) if fits else (1, -(kk * ss))
            if best is None or key < best[0]:
                best = (key, kk, ss)
    return best[1], best[2]


def _flat_add(x1, x2, vmem_limit, fresh_cap):
    """Identical shapes, no pooling/padding: fully lane-dense flat add."""
    n = x1.shape[0]
    total = int(np.prod(x1.shape[1:]))
    if total % 128 != 0:
        return None
    lane = next(l for l in (2048, 1024, 512, 256, 128) if total % l == 0)
    rows = total // lane
    itemsize = jnp.dtype(x1.dtype).itemsize
    cands = [d for d in range(1, rows + 1)
             if rows % d == 0 and (d % 8 == 0 or d == rows)]
    fit = [d for d in cands if 3 * d * lane * itemsize <= fresh_cap]
    row_blk = max(fit) if fit else min(cands)

    a = x1.reshape(n, rows, lane)
    b = x2.reshape(n, rows, lane)
    out = pl.pallas_call(
        _add_kernel,
        out_shape=jax.ShapeDtypeStruct((n, rows, lane), x1.dtype),
        grid=(n, rows // row_blk),
        in_specs=[pl.BlockSpec((1, row_blk, lane), lambda i, j: (i, j, 0)),
                  pl.BlockSpec((1, row_blk, lane), lambda i, j: (i, j, 0))],
        out_specs=pl.BlockSpec((1, row_blk, lane), lambda i, j: (i, j, 0)),
        compiler_params=pltpu.CompilerParams(
            dimension_semantics=("parallel", "parallel"),
            vmem_limit_bytes=vmem_limit),
    )(a, b)
    return out.reshape(x1.shape)


# --------------------------------- entry point ---------------------------------

def pallas_sum(inputs1, inputs2):
    """Forward pass of the PyTorch `Sum` module, fused in one Pallas kernel."""
    x1, x2 = inputs1, inputs2
    n, c1, h1, w1 = x1.shape
    n2, c2, h2, w2 = x2.shape
    assert n == n2 and x1.dtype == x2.dtype

    vmem_limit, fresh_cap = _budgets()

    # Integer pooling-factor derivation (power-of-two spatial ratio).
    f1 = f2 = 1
    if h1 != h2:
        if h1 > h2:
            f1 = h1 // h2
        else:
            f2 = h2 // h1
    f = max(f1, f2)
    assert f & (f - 1) == 0, "spatial ratio must be a power of two"
    assert h1 % f1 == 0 and w1 % f1 == 0 and h2 % f2 == 0 and w2 % f2 == 0
    assert (h1 // f1, w1 // f1) == (h2 // f2, w2 // f2), "pooled shapes differ"

    # Fast path: identical shapes -> plain lane-dense elementwise add.
    if f == 1 and c1 == c2:
        out = _flat_add(x1, x2, vmem_limit, fresh_cap)
        if out is not None:
            return out

    ho, wo = h1 // f1, w1 // f1
    sp = ho * wo
    cmax = max(c1, c2)
    dtype = x1.dtype
    itemsize = jnp.dtype(dtype).itemsize

    # Free (row-major) reshapes only -- no XLA transpose / extra HBM pass.
    a = x1.reshape(n, c1, h1 * w1)
    b = x2.reshape(n, c2, h2 * w2)

    ksplit, ssplit = _choose_splits(c1, c2, cmax, ho, wo, f1, f2, w1, w2,
                                    itemsize, vmem_limit, fresh_cap)
    rho = ho // ssplit   # pooled rows per spatial tile

    kernel, has_s = _make_kernel(f1, f2, w1, w2, dtype)

    in_specs, args = [], []
    if has_s:
        if f1 > 1:
            s = _selection_matrix(f1, w1, rho, wo, dtype)
        else:
            s = _selection_matrix(f2, w2, rho, wo, dtype)
        # Constant block index -> fetched once, stays resident across steps.
        # TODO(synk): pipeline_mode=pl.Buffered(1) would halve its footprint.
        in_specs.append(pl.BlockSpec(s.shape, lambda i, k, j: (0, 0)))
        args.append(s)
    in_specs += [
        pl.BlockSpec((1, c1 // ksplit, rho * f1 * w1),
                     lambda i, k, j: (i, k, j)),
        pl.BlockSpec((1, c2 // ksplit, rho * f2 * w2),
                     lambda i, k, j: (i, k, j)),
    ]
    args += [a, b]

    out = pl.pallas_call(
        kernel,
        out_shape=jax.ShapeDtypeStruct((n, cmax, sp), dtype),
        grid=(n, ksplit, ssplit),
        in_specs=in_specs,
        out_specs=pl.BlockSpec((1, cmax // ksplit, rho * wo),
                               lambda i, k, j: (i, k, j)),
        compiler_params=pltpu.CompilerParams(
            dimension_semantics=("parallel", "parallel", "parallel"),
            vmem_limit_bytes=vmem_limit),
    )(*args)

    return out.reshape(n, cmax, ho, wo)   # NCHW: (N, max(C1, C2), Ho, Wo)


# ---- pure-JAX reference (mirrors the torch code) for correctness checking ----
def _maxpool2x2(x):
    n, c, h, w = x.shape
    return x.reshape(n, c, h // 2, 2, w // 2, 2).max(axis=(3, 5))


def _reference_sum(x1, x2):
    data = [x1, x2]
    if data[0].shape[2] != data[1].shape[2]:
        small, large = (0, 1) if data[0].shape[2] < data[1].shape[2] else (1, 0)
        pool_num = int(math.log2(data[large].shape[2]) -
                       math.log2(data[small].shape[2]))
        for _ in range(pool_num):
            data[large] = _maxpool2x2(data[large])
    small_c, large_c = (0, 1) if data[0].shape[1] < data[1].shape[1] else (1, 0)
    offset = data[large_c].shape[1] - data[small_c].shape[1]
    if offset != 0:
        pad = jnp.zeros_like(data[large_c][:, :offset])
        data[small_c] = jnp.concatenate([data[small_c], pad], axis=1)
    return data[0] + data[1]


if __name__ == "__main__":
    key = jax.random.PRNGKey(0)
    cases = [
        ((2, 4, 16, 16), (2, 8, 8, 8)),    # pool input1 (f=2), pad its channels
        ((2, 8, 8, 8), (2, 4, 16, 16)),    # pool input2 (f=2), pad its channels
        ((2, 4, 32, 32), (2, 8, 8, 8)),    # f=4 -> separable log-tree pooling
        ((2, 8, 8, 8), (2, 8, 8, 8)),      # identical shapes -> flat add path
    ]
    for idx, (sa, sb) in enumerate(cases):
        k1, k2 = jax.random.split(jax.random.fold_in(key, idx))
        x1 = jax.random.normal(k1, sa, dtype=jnp.float32)
        x2 = jax.random.normal(k2, sb, dtype=jnp.float32)
        out = jax.block_until_ready(pallas_sum(x1, x2))
        ref = _reference_sum(x1, x2)
        np.testing.assert_allclose(np.asarray(out), np.asarray(ref),
                                   rtol=1e-5, atol=1e-5)
    print("KERNEL_OK")
</pallas_src>

<mosaic_0001>
module attributes {stable_mosaic.version = 11 : i64} {
  func.func @kernel(%arg0: i32, %arg1: i32, %arg2: i32, %arg3: memref<256x64xf32, #tpu.memory_space<vmem>>, %arg4: memref<1x4x256xf32, #tpu.memory_space<vmem>>, %arg5: memref<1x8x64xf32, #tpu.memory_space<vmem>>, %arg6: memref<1x8x64xf32, #tpu.memory_space<vmem>>) attributes {dimension_semantics = [#tpu.dimension_semantics<parallel>, #tpu.dimension_semantics<parallel>, #tpu.dimension_semantics<parallel>], iteration_bounds = array<i64: 2, 1, 1>, scalar_prefetch = 0 : i64, scratch_operands = 0 : i64, tpu.core_type = #tpu.core_type<tc>, window_params = [{pipeline_mode = #tpu.pipeline_mode<synchronous>, transform_indices = @transform_0, window_bounds = array<i64: 256, 64>}, {transform_indices = @transform_1, window_bounds = array<i64: 1, 4, 256>}, {transform_indices = @transform_2, window_bounds = array<i64: 1, 8, 64>}, {transform_indices = @transform_3, window_bounds = array<i64: 1, 8, 64>}]} {
    %c0 = arith.constant 0 : index
    %c0_0 = arith.constant 0 : index
    %c0_1 = arith.constant 0 : index
    %0 = vector.load %arg4[%c0, %c0_0, %c0_1] : memref<1x4x256xf32, #tpu.memory_space<vmem>>, vector<1x4x256xf32>
    %1 = vector.shape_cast %0 : vector<1x4x256xf32> to vector<4x256xf32>
    %c255_i32 = arith.constant 255 : i32
    %2 = tpu.dynamic_rotate %1 by %c255_i32 dim 1 : vector<4x256xf32>, i32 -> vector<4x256xf32>
    %3 = arith.maximumf %1, %2 : vector<4x256xf32>
    %c240_i32 = arith.constant 240 : i32
    %4 = tpu.dynamic_rotate %3 by %c240_i32 dim 1 : vector<4x256xf32>, i32 -> vector<4x256xf32>
    %5 = arith.maximumf %3, %4 : vector<4x256xf32>
    %c0_2 = arith.constant 0 : index
    %c0_3 = arith.constant 0 : index
    %6 = vector.load %arg3[%c0_2, %c0_3] : memref<256x64xf32, #tpu.memory_space<vmem>>, vector<256x64xf32>
    %cst = arith.constant dense<0.000000e+00> : vector<4x64xf32>
    %7 = tpu.matmul %5, %6, %cst {dimension_numbers = #tpu.dot_dimension_numbers<[1], [0], [0], [1], [0, 0, 1, 1], [], []>, precision = #tpu.contract_precision<fp32>} : vector<4x256xf32>, vector<256x64xf32>, vector<4x64xf32> -> vector<4x64xf32>
    %c0_4 = arith.constant 0 : index
    %c0_5 = arith.constant 0 : index
    %c0_6 = arith.constant 0 : index
    %8 = vector.load %arg5[%c0_4, %c0_5, %c0_6] : memref<1x8x64xf32, #tpu.memory_space<vmem>>, vector<1x8x64xf32>
    %9 = vector.shape_cast %8 : vector<1x8x64xf32> to vector<8x64xf32>
    %10 = vector.extract_strided_slice %9 {offsets = [0, 0], sizes = [4, 64], strides = [1, 1]} : vector<8x64xf32> to vector<4x64xf32>
    %11 = arith.addf %7, %10 : vector<4x64xf32>
    %12 = vector.extract_strided_slice %9 {offsets = [4, 0], sizes = [4, 64], strides = [1, 1]} : vector<8x64xf32> to vector<4x64xf32>
    %13 = tpu.concatenate %11, %12 in 0 : vector<4x64xf32>, vector<4x64xf32> -> vector<8x64xf32>
    %c0_7 = arith.constant 0 : index
    %c0_8 = arith.constant 0 : index
    %c0_9 = arith.constant 0 : index
    %14 = vector.load %arg6[%c0_7, %c0_8, %c0_9] : memref<1x8x64xf32, #tpu.memory_space<vmem>>, vector<1x8x64xf32>
    %15 = vector.shape_cast %14 : vector<1x8x64xf32> to vector<8x64xf32>
    %16 = vector.shape_cast %13 : vector<8x64xf32> to vector<1x8x64xf32>
    tpu.vector_store %arg6[%c0_7, %c0_8, %c0_9], %16 {strides = array<i32>} : memref<1x8x64xf32, #tpu.memory_space<vmem>>, vector<1x8x64xf32>,
    return
  }
  func.func @transform_0(%arg0: i32, %arg1: i32, %arg2: i32) -> (i32, i32) {
    %c0_i32 = arith.constant 0 : i32
    %c0_i32_0 = arith.constant 0 : i32
    %c0_i32_1 = arith.constant 0 : i32
    return %c0_i32, %c0_i32_0 : i32, i32
  }
  func.func @transform_1(%arg0: i32, %arg1: i32, %arg2: i32) -> (i32, i32, i32) {
    %c0_i32 = arith.constant 0 : i32
    return %arg0, %arg1, %arg2 : i32, i32, i32
  }
  func.func @transform_2(%arg0: i32, %arg1: i32, %arg2: i32) -> (i32, i32, i32) {
    %c0_i32 = arith.constant 0 : i32
    return %arg0, %arg1, %arg2 : i32, i32, i32
  }
  func.func @transform_3(%arg0: i32, %arg1: i32, %arg2: i32) -> (i32, i32, i32) {
    %c0_i32 = arith.constant 0 : i32
    return %arg0, %arg1, %arg2 : i32, i32, i32
  }
}

</mosaic_0001>

<llo_original>
// kernel: tpu_custom_call.1
$region0: #{tpu_custom_call.1}
  #allocation0 [shape = 'u32[]', space=smem, size = 0x4, offset = 0x4, fixed_abs, tag = 'smem constant byte address 0x4 - core index']
  #allocation1 [shape = 'u32[72,128]{1,0:T(1,128)}', space=vmem, size = 0x9000, scoped, tag = 'internal scratch']
  %s0 = inlined_call_operand.vmem [shape: f32[256,64], index: 0, kind: input, shape index: {}]
  %s1 = inlined_call_operand.vmem [shape: f32[2,4,256], index: 1, kind: input, shape index: {}]
  %s2 = inlined_call_operand.vmem [shape: f32[2,8,64], index: 2, kind: input, shape index: {}]
  %s3 = inlined_call_operand.hbm [shape: f32[2,8,64], index: 3, kind: output, shape index: {}]
  %s4 = sld [smem:[#allocation0]]
  $region45: #{tpu_custom_call.1} parent=0
    _
  %s6 = ssub.s32 1, %s4
  %s7 = scalar_select 0, %s6, %s4
  $region1: #{tpu_custom_call.1} parent=0
    #allocation2 [shape = 'u8[8192]{0}', space=vmem, size = 0x2000, scoped, tag = 'output window, operand 0']
    #allocation3 [shape = 's32[2]{0}', space=sflag, size = 0x8, scoped, tag = 'scoped memory for tpu_custom_call.1']
    %8 = vsyncpa [#allocation3], 0
    %s9 = scalar_lea.sflag [#allocation3], 1
    %10 = vsyncpa %s9, 0
    loop: start=0, step=1, limit=4
    $region2: #{tpu_custom_call.1} parent=1 // loop_pre_header
      _
    $region3: #{tpu_custom_call.1} parent=1 // loop_header
      %s12 = sphi 0, %s16
      %p13 = scmp.ge.s32.totalorder %s12, 4
      %s19 = sphi 0, %s38
      %s20 = sphi 0, %s34
      %s21 = sphi 0, %s30
      %s22 = sphi 0, %s19
      %s23 = sphi 0, %s20
      %s24 = sphi 0, %s21
      %s25 = sphi 0, %s22
      %s26 = sphi 0, %s23
      %s27 = sphi 0, %s24
      %s39 = sphi 0, %s39
      %s41 = sphi 0, %s39
      %s42 = sphi 0, %s41
      %s56 = sphi 0, %s42
      %s66 = sphi 0, %s68
      %s69 = sphi 0, %s66
      %s70 = sphi 0, %s69
      %s86 = sphi 0, %s70
      %s96 = sphi 0, %s98
      %s99 = sphi 0, %s96
      %s100 = sphi 0, %s99
      %s116 = sphi 0, %s100
      %s126 = sphi 0, %s128
      %s129 = sphi 0, %s126
      %s130 = sphi 0, %s129
      %s146 = sphi 0, %s130
    $region4: #{tpu_custom_call.1} parent=1 // loop_header_branch
      %15 = sbr.rel (%p13) target = $region8
    $region5: #{tpu_custom_call.1} parent=1 // loop_body
      %s17 = ssub.s32 %s12, 1
      %s18 = ssub.s32 %s12, 2
      %s28 = sadd.s32 1, %s21
      %p29 = scmp.ge.s32.totalorder %s28, 1
      %s30 = scalar_select %p29, 0, %s28
      %s31 = sadd.s32 1, %s20
      %s32 = scalar_select %p29, %s31, %s20
      %p33 = scmp.ge.s32.totalorder %s32, 1
      %s34 = scalar_select %p33, 0, %s32
      %s35 = sadd.s32 1, %s19
      %s36 = scalar_select %p33, %s35, %s19
      %p37 = scmp.ge.s32.totalorder %s36, 2
      %s38 = scalar_select %p37, 0, %s36
      %s40 = sadd.s32 %s39, 1
      %p43 = scmp.eq.s32.totalorder %s12, 1
      %p44 = scmp.ne.s32.totalorder %s39, %s41
      %p45 = scmp.eq.s32.totalorder %s12, 0
      %p46 = por %p44, %p45
      %p47 = scmp.ne.s32.totalorder %s39, %s41
      %p48 = scmp.eq.s32.totalorder %s17, 1
      %p49 = por %p47, %p48
      %p50 = scmp.ne.s32.totalorder %s41, %s42
      %p51 = scmp.eq.s32.totalorder %s17, 0
      %p52 = por %p50, %p51
      %p53 = scmp.ne.s32.totalorder %s41, %s42
      %p54 = scmp.eq.s32.totalorder %s18, 1
      %p55 = por %p53, %p54
      %p57 = scmp.ne.s32.totalorder %s42, %s56
      %p58 = scmp.eq.s32.totalorder %s18, 0
      %p59 = por %p57, %p58
      %s60 = ssub.s32 %s19, %s38
      %s61 = ssub.s32 %s20, %s34
      %s62 = sor.u32 %s60, %s61
      %s63 = ssub.s32 %s21, %s30
      %s64 = sor.u32 %s62, %s63
      %p65 = scmp.eq.s32.totalorder %s64, 0
      %s67 = sadd.s32 %s66, 1
      %s68 = scalar_select %p65, %s66, %s67
      %p71 = pneg %p65
      %p72 = scmp.eq.s32.totalorder %s12, 1
      %p73 = por %p71, %p72
      %p74 = scmp.ne.s32.totalorder %s66, %s69
      %p75 = scmp.eq.s32.totalorder %s12, 0
      %p76 = por %p74, %p75
      %p77 = scmp.ne.s32.totalorder %s66, %s69
      %p78 = scmp.eq.s32.totalorder %s17, 1
      %p79 = por %p77, %p78
      %p80 = scmp.ne.s32.totalorder %s69, %s70
      %p81 = scmp.eq.s32.totalorder %s17, 0
      %p82 = por %p80, %p81
      %p83 = scmp.ne.s32.totalorder %s69, %s70
      %p84 = scmp.eq.s32.totalorder %s18, 1
      %p85 = por %p83, %p84
      %p87 = scmp.ne.s32.totalorder %s70, %s86
      %p88 = scmp.eq.s32.totalorder %s18, 0
      %p89 = por %p87, %p88
      %s90 = ssub.s32 %s19, %s38
      %s91 = ssub.s32 %s20, %s34
      %s92 = sor.u32 %s90, %s91
      %s93 = ssub.s32 %s21, %s30
      %s94 = sor.u32 %s92, %s93
      %p95 = scmp.eq.s32.totalorder %s94, 0
      %s97 = sadd.s32 %s96, 1
      %s98 = scalar_select %p95, %s96, %s97
      %p101 = pneg %p95
      %p102 = scmp.eq.s32.totalorder %s12, 1
      %p103 = por %p101, %p102
      %p104 = scmp.ne.s32.totalorder %s96, %s99
      %p105 = scmp.eq.s32.totalorder %s12, 0
      %p106 = por %p104, %p105
      %p107 = scmp.ne.s32.totalorder %s96, %s99
      %p108 = scmp.eq.s32.totalorder %s17, 1
      %p109 = por %p107, %p108
      %p110 = scmp.ne.s32.totalorder %s99, %s100
      %p111 = scmp.eq.s32.totalorder %s17, 0
      %p112 = por %p110, %p111
      %p113 = scmp.ne.s32.totalorder %s99, %s100
      %p114 = scmp.eq.s32.totalorder %s18, 1
      %p115 = por %p113, %p114
      %p117 = scmp.ne.s32.totalorder %s100, %s116
      %p118 = scmp.eq.s32.totalorder %s18, 0
      %p119 = por %p117, %p118
      %s120 = ssub.s32 %s19, %s38
      %s121 = ssub.s32 %s20, %s34
      %s122 = sor.u32 %s120, %s121
      %s123 = ssub.s32 %s21, %s30
      %s124 = sor.u32 %s122, %s123
      %p125 = scmp.eq.s32.totalorder %s124, 0
      %s127 = sadd.s32 %s126, 1
      %s128 = scalar_select %p125, %s126, %s127
      %p131 = pneg %p125
      %p132 = scmp.eq.s32.totalorder %s12, 1
      %p133 = por %p131, %p132
      %p134 = scmp.ne.s32.totalorder %s126, %s129
      %p135 = scmp.eq.s32.totalorder %s12, 0
      %p136 = por %p134, %p135
      %p137 = scmp.ne.s32.totalorder %s126, %s129
      %p138 = scmp.eq.s32.totalorder %s17, 1
      %p139 = por %p137, %p138
      %p140 = scmp.ne.s32.totalorder %s129, %s130
      %p141 = scmp.eq.s32.totalorder %s17, 0
      %p142 = por %p140, %p141
      %p143 = scmp.ne.s32.totalorder %s129, %s130
      %p144 = scmp.eq.s32.totalorder %s18, 1
      %p145 = por %p143, %p144
      %p147 = scmp.ne.s32.totalorder %s130, %s146
      %p148 = scmp.eq.s32.totalorder %s18, 0
      %p149 = por %p147, %p148
      %p150 = scmp.le.s32.totalorder 1, %s12
      %p151 = scmp.lt.s32.totalorder %s12, 3
      %p152 = pnand %p150, %p151
      %p153 = pneg %p152
      // Predicated region
      $region9: #{tpu_custom_call.1} parent=5 // pred_check
        _
      $region10: #{tpu_custom_call.1} parent=5 // pred_check_branch
        %155 = sbr.rel (%p152) target = $region12
      $region11: #{tpu_custom_call.1} parent=5 // pred_region
        %s156 = ssub.s32 %s12, 1
        // Predicated region
        $region13: #{tpu_custom_call.1} parent=11 // pred_check
          %p157 = pneg %p52
        $region14: #{tpu_custom_call.1} parent=11 // pred_check_branch
          %159 = sbr.rel (%p157) target = $region16
        $region15: #{tpu_custom_call.1} parent=11 // pred_region
          _
        $region16: #{tpu_custom_call.1} parent=11 // pred_fallthru
          _
      $region12: #{tpu_custom_call.1} parent=5 // pred_fallthru
        _
      %p160 = scmp.lt.s32.totalorder %s12, 2
      // Predicated region
      $region17: #{tpu_custom_call.1} parent=5 // pred_check
        %p161 = pneg %p160
      $region18: #{tpu_custom_call.1} parent=5 // pred_check_branch
        %163 = sbr.rel (%p161) target = $region20
      $region19: #{tpu_custom_call.1} parent=5 // pred_region
        // Predicated region
        $region21: #{tpu_custom_call.1} parent=19 // pred_check
          %p164 = pneg %p76
        $region22: #{tpu_custom_call.1} parent=19 // pred_check_branch
          %166 = sbr.rel (%p164) target = $region24
        $region23: #{tpu_custom_call.1} parent=19 // pred_region
          %s167 = smul.u32 2, %s21
          %p168 = scmp.lt.s32.totalorder %s19, 1
          %s169 = scalar_select %p168, %s19, 1
          %p170 = scmp.lt.s32.totalorder %s20, 0
          %s171 = scalar_select %p170, %s20, 0
          %p172 = scmp.lt.s32.totalorder %s167, 1
          %s173 = scalar_select %p172, %s167, 1
          %s174 = smul.addr %s171, 2
          %s175 = sadd.s32 %s173, %s174
          %s176 = smul.addr %s169, 2
          %s177 = sadd.s32 %s175, %s176
          %s178 = smul.addr %s177, 4
          %s179 = scalar_lea.vmem %s1, %s178
          %s180 = smul.u32 2, %s21
        $region24: #{tpu_custom_call.1} parent=19 // pred_fallthru
          _
        // Predicated region
        $region25: #{tpu_custom_call.1} parent=19 // pred_check
          %p181 = pneg %p106
        $region26: #{tpu_custom_call.1} parent=19 // pred_check_branch
          %183 = sbr.rel (%p181) target = $region28
        $region27: #{tpu_custom_call.1} parent=19 // pred_region
          %p184 = scmp.lt.s32.totalorder %s19, 1
          %s185 = scalar_select %p184, %s19, 1
          %p186 = scmp.lt.s32.totalorder %s20, 0
          %s187 = scalar_select %p186, %s20, 0
          %p188 = scmp.lt.s32.totalorder %s21, 0
          %s189 = scalar_select %p188, %s21, 0
          %s190 = sadd.s32 %s189, %s187
          %s191 = sadd.s32 %s190, %s185
          %s192 = smul.addr %s191, 8
          %s193 = scalar_lea.vmem %s2, %s192
        $region28: #{tpu_custom_call.1} parent=19 // pred_fallthru
          _
      $region20: #{tpu_custom_call.1} parent=5 // pred_fallthru
        _
      %p194 = scmp.le.s32.totalorder 1, %s12
      %p195 = scmp.lt.s32.totalorder %s12, 3
      %p196 = pnand %p194, %p195
      %p197 = pneg %p196
      // Predicated region
      $region29: #{tpu_custom_call.1} parent=5 // pred_check
        _
      $region30: #{tpu_custom_call.1} parent=5 // pred_check_branch
        %199 = sbr.rel (%p196) target = $region32
      $region31: #{tpu_custom_call.1} parent=5 // pred_region
        %s200 = ssub.s32 %s12, 1
        %p201 = pneg %p52
        %p202 = pneg %p49
        %s203 = smul.u32 2, %s24
        %p204 = scmp.lt.s32.totalorder %s22, 1
        %s205 = scalar_select %p204, %s22, 1
        %p206 = scmp.lt.s32.totalorder %s23, 0
        %s207 = scalar_select %p206, %s23, 0
        %p208 = scmp.lt.s32.totalorder %s203, 1
        %s209 = scalar_select %p208, %s203, 1
        %s210 = smul.addr %s207, 2
        %s211 = sadd.s32 %s209, %s210
        %s212 = smul.addr %s205, 2
        %s213 = sadd.s32 %s211, %s212
        %s214 = smul.addr %s213, 4
        %s215 = scalar_lea.vmem %s1, %s214
        %p216 = pneg %p82
        %p217 = pneg %p79
        %p218 = scmp.lt.s32.totalorder %s22, 1
        %s219 = scalar_select %p218, %s22, 1
        %p220 = scmp.lt.s32.totalorder %s23, 0
        %s221 = scalar_select %p220, %s23, 0
        %p222 = scmp.lt.s32.totalorder %s24, 0
        %s223 = scalar_select %p222, %s24, 0
        %s224 = sadd.s32 %s223, %s221
        %s225 = sadd.s32 %s224, %s219
        %s226 = smul.addr %s225, 8
        %s227 = scalar_lea.vmem %s2, %s226
        %p228 = pneg %p112
        %p229 = pneg %p109
        %p230 = pneg %p142
        %p231 = pneg %p139
        %s232 = sand.u32 %s129, 1
        %s233 = scalar_lea.sflag [#allocation3], %s232
        %s234 = sand.u32 %s129, 1
        %s235 = smul.addr %s234, 8
        %s236 = scalar_lea.vmem [#allocation2], %s235
        %s237 = smul.u32 2, %s24
        %p238 = scmp.lt.s32.totalorder %s22, 1
        %s239 = scalar_select %p238, %s22, 1
        %p240 = scmp.lt.s32.totalorder %s23, 0
        %s241 = scalar_select %p240, %s23, 0
        %p242 = scmp.lt.s32.totalorder %s237, 1
        %s243 = scalar_select %p242, %s237, 1
        %s244 = smul.addr %s241, 2
        %s245 = sadd.s32 %s243, %s244
        %s246 = smul.addr %s239, 2
        %s247 = sadd.s32 %s245, %s246
        %s248 = smul.addr %s247, 4
        %s249 = scalar_lea.vmem %s1, %s248
        %s250 = smul.u32 2, %s24
        %p251 = scmp.lt.s32.totalorder %s22, 1
        %s252 = scalar_select %p251, %s22, 1
        %p253 = scmp.lt.s32.totalorder %s23, 0
        %s254 = scalar_select %p253, %s23, 0
        %p255 = scmp.lt.s32.totalorder %s24, 0
        %s256 = scalar_select %p255, %s24, 0
        %s257 = sadd.s32 %s256, %s254
        %s258 = sadd.s32 %s257, %s252
        %s259 = smul.addr %s258, 8
        %s260 = scalar_lea.vmem %s2, %s259
        %v261 = vld [vmem:[%s249] sm:$0xff]
        %263 = vst [vmem:[#allocation1] ss:$2 sm:$0xff] %v261
        %v264 = vld.sshfl [vmem:[#allocation1] sm:$0xff pattern:$0x75316420]
        %v265 = vld.sshfl [vmem:[#allocation1 + $0x8] sm:$0xff pattern:$0x75316420]
        %268 = vrot.lane.b32.xlu0 %v264, 127
        %v269 = vpop.permute.xlu0 %268
        %270 = vrot.lane.b32.xlu0 %v265, 127
        %v271 = vpop.permute.xlu0 %270
        %v272 = vlaneseq
        %v273 = vand.u32 %v272, 127
        %vm274 = vcmp.lt.s32.totalorder %v273, 127
        %v275 = vsel %vm274, %v269, %v271
        %v276 = vsel %vm274, %v271, %v269
        %v279 = vrot.slane %v276, 4
        %vm280 = vcmask 1043456
        %v281 = vsel %vm280, %v275, %v279
        %v283 = vmax.f32 %v261, %v281
        %285 = vst [vmem:[#allocation1] ss:$2 sm:$0xff] %v283
        %v286 = vld.sshfl [vmem:[#allocation1] sm:$0xff pattern:$0x75316420]
        %v287 = vld.sshfl [vmem:[#allocation1 + $0x8] sm:$0xff pattern:$0x75316420]
        %290 = vrot.lane.b32.xlu0 %v286, 112
        %v291 = vpop.permute.xlu0 %290
        %292 = vrot.lane.b32.xlu0 %v287, 112
        %v293 = vpop.permute.xlu0 %292
        %vm294 = vcmp.lt.s32.totalorder %v273, 112
        %v295 = vsel %vm294, %v291, %v293
        %v296 = vsel %vm294, %v293, %v291
        %v299 = vrot.slane %v296, 4
        %v300 = vsel %vm280, %v295, %v299
        %v302 = vmax.f32 %v283, %v300
        %v303 = vld [vmem:[%s0] sm:$0xff]
        %v304 = vld [vmem:[%s0 + $0x8] sm:$0xff]
        %v305 = vld [vmem:[%s0 + $0x10] sm:$0xff]
        %v306 = vld [vmem:[%s0 + $0x18] sm:$0xff]
        %v307 = vld [vmem:[%s0 + $0x20] sm:$0xff]
        %v308 = vld [vmem:[%s0 + $0x28] sm:$0xff]
        %v309 = vld [vmem:[%s0 + $0x30] sm:$0xff]
        %v310 = vld [vmem:[%s0 + $0x38] sm:$0xff]
        %v311 = vld [vmem:[%s0 + $0x40] sm:$0xff]
        %v312 = vld [vmem:[%s0 + $0x48] sm:$0xff]
        %v313 = vld [vmem:[%s0 + $0x50] sm:$0xff]
        %v314 = vld [vmem:[%s0 + $0x58] sm:$0xff]
        %v315 = vld [vmem:[%s0 + $0x60] sm:$0xff]
        %v316 = vld [vmem:[%s0 + $0x68] sm:$0xff]
        %v317 = vld [vmem:[%s0 + $0x70] sm:$0xff]
        %v318 = vld [vmem:[%s0 + $0x78] sm:$0xff]
        %v319 = vld [vmem:[%s0 + $0x80] sm:$0xff]
        %v320 = vld [vmem:[%s0 + $0x88] sm:$0xff]
        %v321 = vld [vmem:[%s0 + $0x90] sm:$0xff]
        %v322 = vld [vmem:[%s0 + $0x98] sm:$0xff]
        %v323 = vld [vmem:[%s0 + $0xa0] sm:$0xff]
        %v324 = vld [vmem:[%s0 + $0xa8] sm:$0xff]
        %v325 = vld [vmem:[%s0 + $0xb0] sm:$0xff]
        %v326 = vld [vmem:[%s0 + $0xb8] sm:$0xff]
        %v327 = vld [vmem:[%s0 + $0xc0] sm:$0xff]
        %v328 = vld [vmem:[%s0 + $0xc8] sm:$0xff]
        %v329 = vld [vmem:[%s0 + $0xd0] sm:$0xff]
        %v330 = vld [vmem:[%s0 + $0xd8] sm:$0xff]
        %v331 = vld [vmem:[%s0 + $0xe0] sm:$0xff]
        %v332 = vld [vmem:[%s0 + $0xe8] sm:$0xff]
        %v333 = vld [vmem:[%s0 + $0xf0] sm:$0xff]
        %v334 = vld [vmem:[%s0 + $0xf8] sm:$0xff]
        %v335 = vld [vmem:[%s260] sm:$0xff]
        %337 = vst [vmem:[#allocation1] ss:$2 sm:$0xff] %v302
        %v338 = vld.sshfl [vmem:[#allocation1] sm:$0xff pattern:$0x75316420]
        %v339 = vld.sshfl [vmem:[#allocation1 + $0x8] sm:$0xff pattern:$0x75316420]
        %v342 = vand.u32 %v318, 4294901760
        %343 = vmatpush.msra.mxu0 %v342
        %v344 = vand.u32 %v317, 4294901760
        %345 = vmatpush.msra.mxu0 %v344
        %v346 = vand.u32 %v316, 4294901760
        %347 = vmatpush.msra.mxu0 %v346
        %v348 = vand.u32 %v315, 4294901760
        %349 = vmatpush.msra.mxu0 %v348
        %v350 = vand.u32 %v314, 4294901760
        %351 = vmatpush.msra.mxu0 %v350
        %v352 = vand.u32 %v313, 4294901760
        %353 = vmatpush.msra.mxu0 %v352
        %v354 = vand.u32 %v312, 4294901760
        %355 = vmatpush.msra.mxu0 %v354
        %v356 = vand.u32 %v311, 4294901760
        %357 = vmatpush.msra.mxu0 %v356
        %v358 = vand.u32 %v310, 4294901760
        %359 = vmatpush.msra.mxu0 %v358
        %v360 = vand.u32 %v309, 4294901760
        %361 = vmatpush.msra.mxu0 %v360
        %v362 = vand.u32 %v308, 4294901760
        %363 = vmatpush.msra.mxu0 %v362
        %v364 = vand.u32 %v307, 4294901760
        %365 = vmatpush.msra.mxu0 %v364
        %v366 = vand.u32 %v306, 4294901760
        %367 = vmatpush.msra.mxu0 %v366
        %v368 = vand.u32 %v305, 4294901760
        %369 = vmatpush.msra.mxu0 %v368
        %v370 = vand.u32 %v304, 4294901760
        %371 = vmatpush.msra.mxu0 %v370
        %v372 = vand.u32 %v303, 4294901760
        %373 = vmatpush.msra.mxu0 %v372
        %v374 = vand.u32 %v338, 4294901760
        %v375 = vsub.f32 %v338, %v374
        %v376 = vand.u32 %v375, 4294901760
        %v377 = vsub.f32 %v375, %v376
        %v378 = vand.u32 %v377, 4294901760
        %379 = vmatmul.f32.gmra.mxu0 %v378
        %v380 = vpop.f32.mrf.mxu0
        %v381 = vadd.f32 %v335, %v380
        %382 = vdwg.mxu0
        %v383 = vand.u32 %v318, 4294901760
        %v384 = vsub.f32 %v318, %v383
        %v385 = vand.u32 %v384, 4294901760
        %v386 = vsub.f32 %v384, %v385
        %v387 = vand.u32 %v386, 4294901760
        %388 = vmatpush.msra.mxu0 %v387
        %v389 = vand.u32 %v317, 4294901760
        %v390 = vsub.f32 %v317, %v389
        %v391 = vand.u32 %v390, 4294901760
        %v392 = vsub.f32 %v390, %v391
        %v393 = vand.u32 %v392, 4294901760
        %394 = vmatpush.msra.mxu0 %v393
        %v395 = vand.u32 %v316, 4294901760
        %v396 = vsub.f32 %v316, %v395
        %v397 = vand.u32 %v396, 4294901760
        %v398 = vsub.f32 %v396, %v397
        %v399 = vand.u32 %v398, 4294901760
        %400 = vmatpush.msra.mxu0 %v399
        %v401 = vand.u32 %v315, 4294901760
        %v402 = vsub.f32 %v315, %v401
        %v403 = vand.u32 %v402, 4294901760
        %v404 = vsub.f32 %v402, %v403
        %v405 = vand.u32 %v404, 4294901760
        %406 = vmatpush.msra.mxu0 %v405
        %v407 = vand.u32 %v314, 4294901760
        %v408 = vsub.f32 %v314, %v407
        %v409 = vand.u32 %v408, 4294901760
        %v410 = vsub.f32 %v408, %v409
        %v411 = vand.u32 %v410, 4294901760
        %412 = vmatpush.msra.mxu0 %v411
        %v413 = vand.u32 %v313, 4294901760
        %v414 = vsub.f32 %v313, %v413
        %v415 = vand.u32 %v414, 4294901760
        %v416 = vsub.f32 %v414, %v415
        %v417 = vand.u32 %v416, 4294901760
        %418 = vmatpush.msra.mxu0 %v417
        %v419 = vand.u32 %v312, 4294901760
        %v420 = vsub.f32 %v312, %v419
        %v421 = vand.u32 %v420, 4294901760
        %v422 = vsub.f32 %v420, %v421
        %v423 = vand.u32 %v422, 4294901760
        %424 = vmatpush.msra.mxu0 %v423
        %v425 = vand.u32 %v311, 4294901760
        %v426 = vsub.f32 %v311, %v425
        %v427 = vand.u32 %v426, 4294901760
        %v428 = vsub.f32 %v426, %v427
        %v429 = vand.u32 %v428, 4294901760
        %430 = vmatpush.msra.mxu0 %v429
        %v431 = vand.u32 %v310, 4294901760
        %v432 = vsub.f32 %v310, %v431
        %v433 = vand.u32 %v432, 4294901760
        %v434 = vsub.f32 %v432, %v433
        %v435 = vand.u32 %v434, 4294901760
        %436 = vmatpush.msra.mxu0 %v435
        %v437 = vand.u32 %v309, 4294901760
        %v438 = vsub.f32 %v309, %v437
        %v439 = vand.u32 %v438, 4294901760
        %v440 = vsub.f32 %v438, %v439
        %v441 = vand.u32 %v440, 4294901760
        %442 = vmatpush.msra.mxu0 %v441
        %v443 = vand.u32 %v308, 4294901760
        %v444 = vsub.f32 %v308, %v443
        %v445 = vand.u32 %v444, 4294901760
        %v446 = vsub.f32 %v444, %v445
        %v447 = vand.u32 %v446, 4294901760
        %448 = vmatpush.msra.mxu0 %v447
        %v449 = vand.u32 %v307, 4294901760
        %v450 = vsub.f32 %v307, %v449
        %v451 = vand.u32 %v450, 4294901760
        %v452 = vsub.f32 %v450, %v451
        %v453 = vand.u32 %v452, 4294901760
        %454 = vmatpush.msra.mxu0 %v453
        %v455 = vand.u32 %v306, 4294901760
        %v456 = vsub.f32 %v306, %v455
        %v457 = vand.u32 %v456, 4294901760
        %v458 = vsub.f32 %v456, %v457
        %v459 = vand.u32 %v458, 4294901760
        %460 = vmatpush.msra.mxu0 %v459
        %v461 = vand.u32 %v305, 4294901760
        %v462 = vsub.f32 %v305, %v461
        %v463 = vand.u32 %v462, 4294901760
        %v464 = vsub.f32 %v462, %v463
        %v465 = vand.u32 %v464, 4294901760
        %466 = vmatpush.msra.mxu0 %v465
        %v467 = vand.u32 %v304, 4294901760
        %v468 = vsub.f32 %v304, %v467
        %v469 = vand.u32 %v468, 4294901760
        %v470 = vsub.f32 %v468, %v469
        %v471 = vand.u32 %v470, 4294901760
        %472 = vmatpush.msra.mxu0 %v471
        %v473 = vand.u32 %v303, 4294901760
        %v474 = vsub.f32 %v303, %v473
        %v475 = vand.u32 %v474, 4294901760
        %v476 = vsub.f32 %v474, %v475
        %v477 = vand.u32 %v476, 4294901760
        %478 = vmatpush.msra.mxu0 %v477
        %v479 = vand.u32 %v338, 4294901760
        %480 = vmatmul.f32.gmra.mxu0 %v479
        %v481 = vpop.f32.mrf.mxu0
        %v482 = vadd.f32 %v381, %v481
        %483 = vdwg.mxu0
        %v484 = vand.u32 %v318, 4294901760
        %v485 = vsub.f32 %v318, %v484
        %486 = vmatpush.msra.mxu0 %v485
        %v487 = vand.u32 %v317, 4294901760
        %v488 = vsub.f32 %v317, %v487
        %489 = vmatpush.msra.mxu0 %v488
        %v490 = vand.u32 %v316, 4294901760
        %v491 = vsub.f32 %v316, %v490
        %492 = vmatpush.msra.mxu0 %v491
        %v493 = vand.u32 %v315, 4294901760
        %v494 = vsub.f32 %v315, %v493
        %495 = vmatpush.msra.mxu0 %v494
        %v496 = vand.u32 %v314, 4294901760
        %v497 = vsub.f32 %v314, %v496
        %498 = vmatpush.msra.mxu0 %v497
        %v499 = vand.u32 %v313, 4294901760
        %v500 = vsub.f32 %v313, %v499
        %501 = vmatpush.msra.mxu0 %v500
        %v502 = vand.u32 %v312, 4294901760
        %v503 = vsub.f32 %v312, %v502
        %504 = vmatpush.msra.mxu0 %v503
        %v505 = vand.u32 %v311, 4294901760
        %v506 = vsub.f32 %v311, %v505
        %507 = vmatpush.msra.mxu0 %v506
        %v508 = vand.u32 %v310, 4294901760
        %v509 = vsub.f32 %v310, %v508
        %510 = vmatpush.msra.mxu0 %v509
        %v511 = vand.u32 %v309, 4294901760
        %v512 = vsub.f32 %v309, %v511
        %513 = vmatpush.msra.mxu0 %v512
        %v514 = vand.u32 %v308, 4294901760
        %v515 = vsub.f32 %v308, %v514
        %516 = vmatpush.msra.mxu0 %v515
        %v517 = vand.u32 %v307, 4294901760
        %v518 = vsub.f32 %v307, %v517
        %519 = vmatpush.msra.mxu0 %v518
        %v520 = vand.u32 %v306, 4294901760
        %v521 = vsub.f32 %v306, %v520
        %522 = vmatpush.msra.mxu0 %v521
        %v523 = vand.u32 %v305, 4294901760
        %v524 = vsub.f32 %v305, %v523
        %525 = vmatpush.msra.mxu0 %v524
        %v526 = vand.u32 %v304, 4294901760
        %v527 = vsub.f32 %v304, %v526
        %528 = vmatpush.msra.mxu0 %v527
        %v529 = vand.u32 %v303, 4294901760
        %v530 = vsub.f32 %v303, %v529
        %531 = vmatpush.msra.mxu0 %v530
        %v532 = vand.u32 %v338, 4294901760
        %v533 = vsub.f32 %v338, %v532
        %534 = vmatmul.f32.gmra.mxu0 %v533
        %v535 = vpop.f32.mrf.mxu0
        %v536 = vadd.f32 %v482, %v535
        %537 = vdwg.mxu0
        %v538 = vand.u32 %v318, 4294901760
        %539 = vmatpush.msra.mxu0 %v538
        %v540 = vand.u32 %v317, 4294901760
        %541 = vmatpush.msra.mxu0 %v540
        %v542 = vand.u32 %v316, 4294901760
        %543 = vmatpush.msra.mxu0 %v542
        %v544 = vand.u32 %v315, 4294901760
        %545 = vmatpush.msra.mxu0 %v544
        %v546 = vand.u32 %v314, 4294901760
        %547 = vmatpush.msra.mxu0 %v546
        %v548 = vand.u32 %v313, 4294901760
        %549 = vmatpush.msra.mxu0 %v548
        %v550 = vand.u32 %v312, 4294901760
        %551 = vmatpush.msra.mxu0 %v550
        %v552 = vand.u32 %v311, 4294901760
        %553 = vmatpush.msra.mxu0 %v552
        %v554 = vand.u32 %v310, 4294901760
        %555 = vmatpush.msra.mxu0 %v554
        %v556 = vand.u32 %v309, 4294901760
        %557 = vmatpush.msra.mxu0 %v556
        %v558 = vand.u32 %v308, 4294901760
        %559 = vmatpush.msra.mxu0 %v558
        %v560 = vand.u32 %v307, 4294901760
        %561 = vmatpush.msra.mxu0 %v560
        %v562 = vand.u32 %v306, 4294901760
        %563 = vmatpush.msra.mxu0 %v562
        %v564 = vand.u32 %v305, 4294901760
        %565 = vmatpush.msra.mxu0 %v564
        %v566 = vand.u32 %v304, 4294901760
        %567 = vmatpush.msra.mxu0 %v566
        %v568 = vand.u32 %v303, 4294901760
        %569 = vmatpush.msra.mxu0 %v568
        %v570 = vand.u32 %v338, 4294901760
        %v571 = vsub.f32 %v338, %v570
        %v572 = vand.u32 %v571, 4294901760
        %573 = vmatmul.f32.gmra.mxu0 %v572
        %v574 = vpop.f32.mrf.mxu0
        %v575 = vadd.f32 %v536, %v574
        %576 = vdwg.mxu0
        %v577 = vand.u32 %v318, 4294901760
        %v578 = vsub.f32 %v318, %v577
        %v579 = vand.u32 %v578, 4294901760
        %580 = vmatpush.msra.mxu0 %v579
        %v581 = vand.u32 %v317, 4294901760
        %v582 = vsub.f32 %v317, %v581
        %v583 = vand.u32 %v582, 4294901760
        %584 = vmatpush.msra.mxu0 %v583
        %v585 = vand.u32 %v316, 4294901760
        %v586 = vsub.f32 %v316, %v585
        %v587 = vand.u32 %v586, 4294901760
        %588 = vmatpush.msra.mxu0 %v587
        %v589 = vand.u32 %v315, 4294901760
        %v590 = vsub.f32 %v315, %v589
        %v591 = vand.u32 %v590, 4294901760
        %592 = vmatpush.msra.mxu0 %v591
        %v593 = vand.u32 %v314, 4294901760
        %v594 = vsub.f32 %v314, %v593
        %v595 = vand.u32 %v594, 4294901760
        %596 = vmatpush.msra.mxu0 %v595
        %v597 = vand.u32 %v313, 4294901760
        %v598 = vsub.f32 %v313, %v597
        %v599 = vand.u32 %v598, 4294901760
        %600 = vmatpush.msra.mxu0 %v599
        %v601 = vand.u32 %v312, 4294901760
        %v602 = vsub.f32 %v312, %v601
        %v603 = vand.u32 %v602, 4294901760
        %604 = vmatpush.msra.mxu0 %v603
        %v605 = vand.u32 %v311, 4294901760
        %v606 = vsub.f32 %v311, %v605
        %v607 = vand.u32 %v606, 4294901760
        %608 = vmatpush.msra.mxu0 %v607
        %v609 = vand.u32 %v310, 4294901760
        %v610 = vsub.f32 %v310, %v609
        %v611 = vand.u32 %v610, 4294901760
        %612 = vmatpush.msra.mxu0 %v611
        %v613 = vand.u32 %v309, 4294901760
        %v614 = vsub.f32 %v309, %v613
        %v615 = vand.u32 %v614, 4294901760
        %616 = vmatpush.msra.mxu0 %v615
        %v617 = vand.u32 %v308, 4294901760
        %v618 = vsub.f32 %v308, %v617
        %v619 = vand.u32 %v618, 4294901760
        %620 = vmatpush.msra.mxu0 %v619
        %v621 = vand.u32 %v307, 4294901760
        %v622 = vsub.f32 %v307, %v621
        %v623 = vand.u32 %v622, 4294901760
        %624 = vmatpush.msra.mxu0 %v623
        %v625 = vand.u32 %v306, 4294901760
        %v626 = vsub.f32 %v306, %v625
        %v627 = vand.u32 %v626, 4294901760
        %628 = vmatpush.msra.mxu0 %v627
        %v629 = vand.u32 %v305, 4294901760
        %v630 = vsub.f32 %v305, %v629
        %v631 = vand.u32 %v630, 4294901760
        %632 = vmatpush.msra.mxu0 %v631
        %v633 = vand.u32 %v304, 4294901760
        %v634 = vsub.f32 %v304, %v633
        %v635 = vand.u32 %v634, 4294901760
        %636 = vmatpush.msra.mxu0 %v635
        %v637 = vand.u32 %v303, 4294901760
        %v638 = vsub.f32 %v303, %v637
        %v639 = vand.u32 %v638, 4294901760
        %640 = vmatpush.msra.mxu0 %v639
        %v641 = vand.u32 %v338, 4294901760
        %642 = vmatmul.f32.gmra.mxu0 %v641
        %v643 = vpop.f32.mrf.mxu0
        %v644 = vadd.f32 %v575, %v643
        %645 = vdwg.mxu0
        %v646 = vand.u32 %v318, 4294901760
        %647 = vmatpush.msra.mxu0 %v646
        %v648 = vand.u32 %v317, 4294901760
        %649 = vmatpush.msra.mxu0 %v648
        %v650 = vand.u32 %v316, 4294901760
        %651 = vmatpush.msra.mxu0 %v650
        %v652 = vand.u32 %v315, 4294901760
        %653 = vmatpush.msra.mxu0 %v652
        %v654 = vand.u32 %v314, 4294901760
        %655 = vmatpush.msra.mxu0 %v654
        %v656 = vand.u32 %v313, 4294901760
        %657 = vmatpush.msra.mxu0 %v656
        %v658 = vand.u32 %v312, 4294901760
        %659 = vmatpush.msra.mxu0 %v658
        %v660 = vand.u32 %v311, 4294901760
        %661 = vmatpush.msra.mxu0 %v660
        %v662 = vand.u32 %v310, 4294901760
        %663 = vmatpush.msra.mxu0 %v662
        %v664 = vand.u32 %v309, 4294901760
        %665 = vmatpush.msra.mxu0 %v664
        %v666 = vand.u32 %v308, 4294901760
        %667 = vmatpush.msra.mxu0 %v666
        %v668 = vand.u32 %v307, 4294901760
        %669 = vmatpush.msra.mxu0 %v668
        %v670 = vand.u32 %v306, 4294901760
        %671 = vmatpush.msra.mxu0 %v670
        %v672 = vand.u32 %v305, 4294901760
        %673 = vmatpush.msra.mxu0 %v672
        %v674 = vand.u32 %v304, 4294901760
        %675 = vmatpush.msra.mxu0 %v674
        %v676 = vand.u32 %v303, 4294901760
        %677 = vmatpush.msra.mxu0 %v676
        %v678 = vand.u32 %v338, 4294901760
        %679 = vmatmul.f32.gmra.mxu0 %v678
        %v680 = vpop.f32.mrf.mxu0
        %v681 = vadd.f32 %v644, %v680
        %682 = vdwg.mxu0
        %v683 = vand.u32 %v334, 4294901760
        %684 = vmatpush.msra.mxu0 %v683
        %v685 = vand.u32 %v333, 4294901760
        %686 = vmatpush.msra.mxu0 %v685
        %v687 = vand.u32 %v332, 4294901760
        %688 = vmatpush.msra.mxu0 %v687
        %v689 = vand.u32 %v331, 4294901760
        %690 = vmatpush.msra.mxu0 %v689
        %v691 = vand.u32 %v330, 4294901760
        %692 = vmatpush.msra.mxu0 %v691
        %v693 = vand.u32 %v329, 4294901760
        %694 = vmatpush.msra.mxu0 %v693
        %v695 = vand.u32 %v328, 4294901760
        %696 = vmatpush.msra.mxu0 %v695
        %v697 = vand.u32 %v327, 4294901760
        %698 = vmatpush.msra.mxu0 %v697
        %v699 = vand.u32 %v326, 4294901760
        %700 = vmatpush.msra.mxu0 %v699
        %v701 = vand.u32 %v325, 4294901760
        %702 = vmatpush.msra.mxu0 %v701
        %v703 = vand.u32 %v324, 4294901760
        %704 = vmatpush.msra.mxu0 %v703
        %v705 = vand.u32 %v323, 4294901760
        %706 = vmatpush.msra.mxu0 %v705
        %v707 = vand.u32 %v322, 4294901760
        %708 = vmatpush.msra.mxu0 %v707
        %v709 = vand.u32 %v321, 4294901760
        %710 = vmatpush.msra.mxu0 %v709
        %v711 = vand.u32 %v320, 4294901760
        %712 = vmatpush.msra.mxu0 %v711
        %v713 = vand.u32 %v319, 4294901760
        %714 = vmatpush.msra.mxu0 %v713
        %v715 = vand.u32 %v339, 4294901760
        %v716 = vsub.f32 %v339, %v715
        %v717 = vand.u32 %v716, 4294901760
        %v718 = vsub.f32 %v716, %v717
        %v719 = vand.u32 %v718, 4294901760
        %720 = vmatmul.f32.gmra.mxu0 %v719
        %v721 = vpop.f32.mrf.mxu0
        %v722 = vadd.f32 %v681, %v721
        %723 = vdwg.mxu0
        %v724 = vand.u32 %v334, 4294901760
        %v725 = vsub.f32 %v334, %v724
        %v726 = vand.u32 %v725, 4294901760
        %v727 = vsub.f32 %v725, %v726
        %v728 = vand.u32 %v727, 4294901760
        %729 = vmatpush.msra.mxu0 %v728
        %v730 = vand.u32 %v333, 4294901760
        %v731 = vsub.f32 %v333, %v730
        %v732 = vand.u32 %v731, 4294901760
        %v733 = vsub.f32 %v731, %v732
        %v734 = vand.u32 %v733, 4294901760
        %735 = vmatpush.msra.mxu0 %v734
        %v736 = vand.u32 %v332, 4294901760
        %v737 = vsub.f32 %v332, %v736
        %v738 = vand.u32 %v737, 4294901760
        %v739 = vsub.f32 %v737, %v738
        %v740 = vand.u32 %v739, 4294901760
        %741 = vmatpush.msra.mxu0 %v740
        %v742 = vand.u32 %v331, 4294901760
        %v743 = vsub.f32 %v331, %v742
        %v744 = vand.u32 %v743, 4294901760
        %v745 = vsub.f32 %v743, %v744
        %v746 = vand.u32 %v745, 4294901760
        %747 = vmatpush.msra.mxu0 %v746
        %v748 = vand.u32 %v330, 4294901760
        %v749 = vsub.f32 %v330, %v748
        %v750 = vand.u32 %v749, 4294901760
        %v751 = vsub.f32 %v749, %v750
        %v752 = vand.u32 %v751, 4294901760
        %753 = vmatpush.msra.mxu0 %v752
        %v754 = vand.u32 %v329, 4294901760
        %v755 = vsub.f32 %v329, %v754
        %v756 = vand.u32 %v755, 4294901760
        %v757 = vsub.f32 %v755, %v756
        %v758 = vand.u32 %v757, 4294901760
        %759 = vmatpush.msra.mxu0 %v758
        %v760 = vand.u32 %v328, 4294901760
        %v761 = vsub.f32 %v328, %v760
        %v762 = vand.u32 %v761, 4294901760
        %v763 = vsub.f32 %v761, %v762
        %v764 = vand.u32 %v763, 4294901760
        %765 = vmatpush.msra.mxu0 %v764
        %v766 = vand.u32 %v327, 4294901760
        %v767 = vsub.f32 %v327, %v766
        %v768 = vand.u32 %v767, 4294901760
        %v769 = vsub.f32 %v767, %v768
        %v770 = vand.u32 %v769, 4294901760
        %771 = vmatpush.msra.mxu0 %v770
        %v772 = vand.u32 %v326, 4294901760
        %v773 = vsub.f32 %v326, %v772
        %v774 = vand.u32 %v773, 4294901760
        %v775 = vsub.f32 %v773, %v774
        %v776 = vand.u32 %v775, 4294901760
        %777 = vmatpush.msra.mxu0 %v776
        %v778 = vand.u32 %v325, 4294901760
        %v779 = vsub.f32 %v325, %v778
        %v780 = vand.u32 %v779, 4294901760
        %v781 = vsub.f32 %v779, %v780
        %v782 = vand.u32 %v781, 4294901760
        %783 = vmatpush.msra.mxu0 %v782
        %v784 = vand.u32 %v324, 4294901760
        %v785 = vsub.f32 %v324, %v784
        %v786 = vand.u32 %v785, 4294901760
        %v787 = vsub.f32 %v785, %v786
        %v788 = vand.u32 %v787, 4294901760
        %789 = vmatpush.msra.mxu0 %v788
        %v790 = vand.u32 %v323, 4294901760
        %v791 = vsub.f32 %v323, %v790
        %v792 = vand.u32 %v791, 4294901760
        %v793 = vsub.f32 %v791, %v792
        %v794 = vand.u32 %v793, 4294901760
        %795 = vmatpush.msra.mxu0 %v794
        %v796 = vand.u32 %v322, 4294901760
        %v797 = vsub.f32 %v322, %v796
        %v798 = vand.u32 %v797, 4294901760
        %v799 = vsub.f32 %v797, %v798
        %v800 = vand.u32 %v799, 4294901760
        %801 = vmatpush.msra.mxu0 %v800
        %v802 = vand.u32 %v321, 4294901760
        %v803 = vsub.f32 %v321, %v802
        %v804 = vand.u32 %v803, 4294901760
        %v805 = vsub.f32 %v803, %v804
        %v806 = vand.u32 %v805, 4294901760
        %807 = vmatpush.msra.mxu0 %v806
        %v808 = vand.u32 %v320, 4294901760
        %v809 = vsub.f32 %v320, %v808
        %v810 = vand.u32 %v809, 4294901760
        %v811 = vsub.f32 %v809, %v810
        %v812 = vand.u32 %v811, 4294901760
        %813 = vmatpush.msra.mxu0 %v812
        %v814 = vand.u32 %v319, 4294901760
        %v815 = vsub.f32 %v319, %v814
        %v816 = vand.u32 %v815, 4294901760
        %v817 = vsub.f32 %v815, %v816
        %v818 = vand.u32 %v817, 4294901760
        %819 = vmatpush.msra.mxu0 %v818
        %v820 = vand.u32 %v339, 4294901760
        %821 = vmatmul.f32.gmra.mxu0 %v820
        %v822 = vpop.f32.mrf.mxu0
        %v823 = vadd.f32 %v722, %v822
        %824 = vdwg.mxu0
        %v825 = vand.u32 %v334, 4294901760
        %v826 = vsub.f32 %v334, %v825
        %827 = vmatpush.msra.mxu0 %v826
        %v828 = vand.u32 %v333, 4294901760
        %v829 = vsub.f32 %v333, %v828
        %830 = vmatpush.msra.mxu0 %v829
        %v831 = vand.u32 %v332, 4294901760
        %v832 = vsub.f32 %v332, %v831
        %833 = vmatpush.msra.mxu0 %v832
        %v834 = vand.u32 %v331, 4294901760
        %v835 = vsub.f32 %v331, %v834
        %836 = vmatpush.msra.mxu0 %v835
        %v837 = vand.u32 %v330, 4294901760
        %v838 = vsub.f32 %v330, %v837
        %839 = vmatpush.msra.mxu0 %v838
        %v840 = vand.u32 %v329, 4294901760
        %v841 = vsub.f32 %v329, %v840
        %842 = vmatpush.msra.mxu0 %v841
        %v843 = vand.u32 %v328, 4294901760
        %v844 = vsub.f32 %v328, %v843
        %845 = vmatpush.msra.mxu0 %v844
        %v846 = vand.u32 %v327, 4294901760
        %v847 = vsub.f32 %v327, %v846
        %848 = vmatpush.msra.mxu0 %v847
        %v849 = vand.u32 %v326, 4294901760
        %v850 = vsub.f32 %v326, %v849
        %851 = vmatpush.msra.mxu0 %v850
        %v852 = vand.u32 %v325, 4294901760
        %v853 = vsub.f32 %v325, %v852
        %854 = vmatpush.msra.mxu0 %v853
        %v855 = vand.u32 %v324, 4294901760
        %v856 = vsub.f32 %v324, %v855
        %857 = vmatpush.msra.mxu0 %v856
        %v858 = vand.u32 %v323, 4294901760
        %v859 = vsub.f32 %v323, %v858
        %860 = vmatpush.msra.mxu0 %v859
        %v861 = vand.u32 %v322, 4294901760
        %v862 = vsub.f32 %v322, %v861
        %863 = vmatpush.msra.mxu0 %v862
        %v864 = vand.u32 %v321, 4294901760
        %v865 = vsub.f32 %v321, %v864
        %866 = vmatpush.msra.mxu0 %v865
        %v867 = vand.u32 %v320, 4294901760
        %v868 = vsub.f32 %v320, %v867
        %869 = vmatpush.msra.mxu0 %v868
        %v870 = vand.u32 %v319, 4294901760
        %v871 = vsub.f32 %v319, %v870
        %872 = vmatpush.msra.mxu0 %v871
        %v873 = vand.u32 %v339, 4294901760
        %v874 = vsub.f32 %v339, %v873
        %875 = vmatmul.f32.gmra.mxu0 %v874
        %v876 = vpop.f32.mrf.mxu0
        %v877 = vadd.f32 %v823, %v876
        %878 = vdwg.mxu0
        %v879 = vand.u32 %v334, 4294901760
        %880 = vmatpush.msra.mxu0 %v879
        %v881 = vand.u32 %v333, 4294901760
        %882 = vmatpush.msra.mxu0 %v881
        %v883 = vand.u32 %v332, 4294901760
        %884 = vmatpush.msra.mxu0 %v883
        %v885 = vand.u32 %v331, 4294901760
        %886 = vmatpush.msra.mxu0 %v885
        %v887 = vand.u32 %v330, 4294901760
        %888 = vmatpush.msra.mxu0 %v887
        %v889 = vand.u32 %v329, 4294901760
        %890 = vmatpush.msra.mxu0 %v889
        %v891 = vand.u32 %v328, 4294901760
        %892 = vmatpush.msra.mxu0 %v891
        %v893 = vand.u32 %v327, 4294901760
        %894 = vmatpush.msra.mxu0 %v893
        %v895 = vand.u32 %v326, 4294901760
        %896 = vmatpush.msra.mxu0 %v895
        %v897 = vand.u32 %v325, 4294901760
        %898 = vmatpush.msra.mxu0 %v897
        %v899 = vand.u32 %v324, 4294901760
        %900 = vmatpush.msra.mxu0 %v899
        %v901 = vand.u32 %v323, 4294901760
        %902 = vmatpush.msra.mxu0 %v901
        %v903 = vand.u32 %v322, 4294901760
        %904 = vmatpush.msra.mxu0 %v903
        %v905 = vand.u32 %v321, 4294901760
        %906 = vmatpush.msra.mxu0 %v905
        %v907 = vand.u32 %v320, 4294901760
        %908 = vmatpush.msra.mxu0 %v907
        %v909 = vand.u32 %v319, 4294901760
        %910 = vmatpush.msra.mxu0 %v909
        %v911 = vand.u32 %v339, 4294901760
        %v912 = vsub.f32 %v339, %v911
        %v913 = vand.u32 %v912, 4294901760
        %914 = vmatmul.f32.gmra.mxu0 %v913
        %v915 = vpop.f32.mrf.mxu0
        %v916 = vadd.f32 %v877, %v915
        %917 = vdwg.mxu0
        %v918 = vand.u32 %v334, 4294901760
        %v919 = vsub.f32 %v334, %v918
        %v920 = vand.u32 %v919, 4294901760
        %921 = vmatpush.msra.mxu0 %v920
        %v922 = vand.u32 %v333, 4294901760
        %v923 = vsub.f32 %v333, %v922
        %v924 = vand.u32 %v923, 4294901760
        %925 = vmatpush.msra.mxu0 %v924
        %v926 = vand.u32 %v332, 4294901760
        %v927 = vsub.f32 %v332, %v926
        %v928 = vand.u32 %v927, 4294901760
        %929 = vmatpush.msra.mxu0 %v928
        %v930 = vand.u32 %v331, 4294901760
        %v931 = vsub.f32 %v331, %v930
        %v932 = vand.u32 %v931, 4294901760
        %933 = vmatpush.msra.mxu0 %v932
        %v934 = vand.u32 %v330, 4294901760
        %v935 = vsub.f32 %v330, %v934
        %v936 = vand.u32 %v935, 4294901760
        %937 = vmatpush.msra.mxu0 %v936
        %v938 = vand.u32 %v329, 4294901760
        %v939 = vsub.f32 %v329, %v938
        %v940 = vand.u32 %v939, 4294901760
        %941 = vmatpush.msra.mxu0 %v940
        %v942 = vand.u32 %v328, 4294901760
        %v943 = vsub.f32 %v328, %v942
        %v944 = vand.u32 %v943, 4294901760
        %945 = vmatpush.msra.mxu0 %v944
        %v946 = vand.u32 %v327, 4294901760
        %v947 = vsub.f32 %v327, %v946
        %v948 = vand.u32 %v947, 4294901760
        %949 = vmatpush.msra.mxu0 %v948
        %v950 = vand.u32 %v326, 4294901760
        %v951 = vsub.f32 %v326, %v950
        %v952 = vand.u32 %v951, 4294901760
        %953 = vmatpush.msra.mxu0 %v952
        %v954 = vand.u32 %v325, 4294901760
        %v955 = vsub.f32 %v325, %v954
        %v956 = vand.u32 %v955, 4294901760
        %957 = vmatpush.msra.mxu0 %v956
        %v958 = vand.u32 %v324, 4294901760
        %v959 = vsub.f32 %v324, %v958
        %v960 = vand.u32 %v959, 4294901760
        %961 = vmatpush.msra.mxu0 %v960
        %v962 = vand.u32 %v323, 4294901760
        %v963 = vsub.f32 %v323, %v962
        %v964 = vand.u32 %v963, 4294901760
        %965 = vmatpush.msra.mxu0 %v964
        %v966 = vand.u32 %v322, 4294901760
        %v967 = vsub.f32 %v322, %v966
        %v968 = vand.u32 %v967, 4294901760
        %969 = vmatpush.msra.mxu0 %v968
        %v970 = vand.u32 %v321, 4294901760
        %v971 = vsub.f32 %v321, %v970
        %v972 = vand.u32 %v971, 4294901760
        %973 = vmatpush.msra.mxu0 %v972
        %v974 = vand.u32 %v320, 4294901760
        %v975 = vsub.f32 %v320, %v974
        %v976 = vand.u32 %v975, 4294901760
        %977 = vmatpush.msra.mxu0 %v976
        %v978 = vand.u32 %v319, 4294901760
        %v979 = vsub.f32 %v319, %v978
        %v980 = vand.u32 %v979, 4294901760
        %981 = vmatpush.msra.mxu0 %v980
        %v982 = vand.u32 %v339, 4294901760
        %983 = vmatmul.f32.gmra.mxu0 %v982
        %v984 = vpop.f32.mrf.mxu0
        %v985 = vadd.f32 %v916, %v984
        %986 = vdwg.mxu0
        %v987 = vand.u32 %v334, 4294901760
        %988 = vmatpush.msra.mxu0 %v987
        %v989 = vand.u32 %v333, 4294901760
        %990 = vmatpush.msra.mxu0 %v989
        %v991 = vand.u32 %v332, 4294901760
        %992 = vmatpush.msra.mxu0 %v991
        %v993 = vand.u32 %v331, 4294901760
        %994 = vmatpush.msra.mxu0 %v993
        %v995 = vand.u32 %v330, 4294901760
        %996 = vmatpush.msra.mxu0 %v995
        %v997 = vand.u32 %v329, 4294901760
        %998 = vmatpush.msra.mxu0 %v997
        %v999 = vand.u32 %v328, 4294901760
        %1000 = vmatpush.msra.mxu0 %v999
        %v1001 = vand.u32 %v327, 4294901760
        %1002 = vmatpush.msra.mxu0 %v1001
        %v1003 = vand.u32 %v326, 4294901760
        %1004 = vmatpush.msra.mxu0 %v1003
        %v1005 = vand.u32 %v325, 4294901760
        %1006 = vmatpush.msra.mxu0 %v1005
        %v1007 = vand.u32 %v324, 4294901760
        %1008 = vmatpush.msra.mxu0 %v1007
        %v1009 = vand.u32 %v323, 4294901760
        %1010 = vmatpush.msra.mxu0 %v1009
        %v1011 = vand.u32 %v322, 4294901760
        %1012 = vmatpush.msra.mxu0 %v1011
        %v1013 = vand.u32 %v321, 4294901760
        %1014 = vmatpush.msra.mxu0 %v1013
        %v1015 = vand.u32 %v320, 4294901760
        %1016 = vmatpush.msra.mxu0 %v1015
        %v1017 = vand.u32 %v319, 4294901760
        %1018 = vmatpush.msra.mxu0 %v1017
        %v1019 = vand.u32 %v339, 4294901760
        %1020 = vmatmul.f32.gmra.mxu0 %v1019
        %v1021 = vpop.f32.mrf.mxu0
        %v1022 = vadd.f32 %v985, %v1021
        %1023 = vdwg.mxu0
        %v1024 = vsel %vm280, %v1022, %v335
        %vm1025 = vcmask 523264
        %1026 = vst.msk [vmem:[%s236] sm:$0xff] %vm1025, %v1024
        %s1027 = sand.u32 %s129, 1
        %s1028 = scalar_lea.sflag [#allocation3], %s1027
        %s1029 = sand.u32 %s129, 1
        %s1030 = smul.addr %s1029, 8
        %s1031 = scalar_lea.vmem [#allocation2], %s1030
        // Predicated region
        $region33: #{tpu_custom_call.1} parent=31 // pred_check
          %p1032 = pneg %p139
        $region34: #{tpu_custom_call.1} parent=31 // pred_check_branch
          %1034 = sbr.rel (%p1032) target = $region36
        $region35: #{tpu_custom_call.1} parent=31 // pred_region
          %1036 = vsyncadd %s1028, 0
          %s1037 = sadd.s32 %s24, %s23
          %s1038 = sadd.s32 %s1037, %s22
          %s1039 = smul.addr %s1038, 8
          %s1040 = scalar_lea.hbm %s3, %s1039
          %s1042 = sshll.u32 %s1031, 4
          %s1043 = int_to_ptr.vmem [resolvable:$true] %s1042
          %s1044 = sshll.u32 %s1040, 4
          %s1045 = int_to_ptr.hbm [resolvable:$true] %s1044
          %1047 = dma.vmem_to_hbm [thread:$0]  %s1043, 128, %s1045, %s1028
        $region36: #{tpu_custom_call.1} parent=31 // pred_fallthru
          _
      $region32: #{tpu_custom_call.1} parent=5 // pred_fallthru
        _
      %p1048 = scmp.le.s32.totalorder 2, %s12
      // Predicated region
      $region37: #{tpu_custom_call.1} parent=5 // pred_check
        %p1049 = pneg %p1048
      $region38: #{tpu_custom_call.1} parent=5 // pred_check_branch
        %1051 = sbr.rel (%p1049) target = $region40
      $region39: #{tpu_custom_call.1} parent=5 // pred_region
        %s1052 = ssub.s32 %s12, 2
        // Predicated region
        $region41: #{tpu_custom_call.1} parent=39 // pred_check
          %p1053 = pneg %p145
        $region42: #{tpu_custom_call.1} parent=39 // pred_check_branch
          %1055 = sbr.rel (%p1053) target = $region44
        $region43: #{tpu_custom_call.1} parent=39 // pred_region
          %s1056 = sand.u32 %s130, 1
          %s1057 = scalar_lea.sflag [#allocation3], %s1056
          %s1058 = sand.u32 %s130, 1
          %s1059 = smul.addr %s1058, 8
          %s1060 = scalar_lea.vmem [#allocation2], %s1059
          %1062 = dma.done %s1057, 128
        $region44: #{tpu_custom_call.1} parent=39 // pred_fallthru
          _
      $region40: #{tpu_custom_call.1} parent=5 // pred_fallthru
        _
    $region6: #{tpu_custom_call.1} parent=1 // loop_footer
      %s16 = sadd.s32 1, %s12
    $region7: #{tpu_custom_call.1} parent=1 // loop_footer_branch
      %11 = sbr.rel target = $region3
    $region8: #{tpu_custom_call.1} parent=1 // loop_exit
      _
    %1063 = vsyncpa [#allocation3], 1
    %s1064 = scalar_lea.sflag [#allocation3], 1
    %1065 = vsyncpa %s1064, 1

</llo_original>
